<compile_context>
chip_gen: v7x
topology: tpu7x:2x2x1
jax: 0.10.0
libtpu: 0.0.40
codegen_flags: <defaults>
</compile_context>

<pallas_src>
import functools

import jax
import jax.numpy as jnp
from jax import lax
from jax.experimental import pallas as pl
from jax.experimental.pallas import tpu as pltpu

_MIN_KERNEL_ELEMS = 2048                    # below this, launch overhead > compute
_LANE_WIDTHS_EXACT = (4096, 2048, 1024, 512)
_LANE_WIDTHS_PREFIX = (4096, 2048, 1024, 512, 256, 128)


def _add10_kernel(x_ref, o_ref):
    # Hot path: elementwise add of the constant 10 on the VPU (HBM-bound).
    o_ref[...] = x_ref[...] + jnp.asarray(10, dtype=x_ref.dtype)


@functools.lru_cache(maxsize=None)
def _chip_config():
    """Pick (target_block_bytes, vmem_limit_bytes) from the TPU generation."""
    target, limit = 4 << 20, 48 << 20        # safe fallback (fits v7x 64 MiB VMEM)
    try:
        info = pltpu.get_tpu_info()
        cap = None
        for attr in ("vmem_capacity_bytes", "vmem_bytes", "vmem_size_bytes"):
            v = getattr(info, attr, None)
            if v:
                cap = int(v)
                break
        if cap is not None:
            if cap >= (100 << 20):           # v5e / v6e: 128 MiB VMEM
                target, limit = 8 << 20, 64 << 20
            else:                             # v7x: 64 MiB VMEM per TensorCore
                target, limit = 6 << 20, 48 << 20
    except Exception:
        pass
    return target, limit


def _sublane_pack(dtype):
    # Packed sublane count: 8 for 4-byte, 16 for 2-byte, 32 for 1-byte dtypes.
    return max(8, 32 // jnp.dtype(dtype).itemsize)


def _pick_lane_width(total):
    """Widest lane-dense C.  Returns (C, exact) — exact=False means a ragged tail."""
    for c in _LANE_WIDTHS_EXACT:
        if total % c == 0:
            return c, True
    for c in _LANE_WIDTHS_PREFIX:
        if c <= total:
            return c, False
    return None, False


def _slab_add10(x2, block_rows, vmem_limit):
    rows, C = x2.shape
    return pl.pallas_call(
        _add10_kernel,
        out_shape=jax.ShapeDtypeStruct((rows, C), x2.dtype),
        grid=(pl.cdiv(rows, block_rows),),
        in_specs=[pl.BlockSpec((block_rows, C), lambda i: (i, 0))],
        out_specs=pl.BlockSpec((block_rows, C), lambda i: (i, 0)),
        input_output_aliases={0: 0},          # elementwise add is safely in place
        compiler_params=pltpu.CompilerParams(
            dimension_semantics=("parallel",),
            vmem_limit_bytes=vmem_limit,
        ),
    )(x2)


@functools.lru_cache(maxsize=None)
def _compiled_forward(shape, dtype_name, donate):
    """Build (and cache) one jitted program per (shape, dtype, donate)."""
    dtype = jnp.dtype(dtype_name)
    total = 1
    for d in shape:
        total *= int(d)

    target_bytes, vmem_limit = _chip_config()
    C, _exact = _pick_lane_width(total)
    rows = total // C
    tail = total - rows * C                   # 0 on the lane-dense-exact path
    itemsize = dtype.itemsize
    pack = _sublane_pack(dtype)

    # Tile rows: big tiles to amortize the ~0.35 us per-step overhead,
    # rounded to the packed sublane count.
    block_rows = max(pack, (target_bytes // (C * itemsize)) // pack * pack)
    block_rows = min(block_rows, rows)
    # Guarantee >= 2 grid steps when there are enough rows, so megacore (v7x)
    # can shard the 1-D parallel grid across both TensorCores.
    if rows >= 2 * pack:
        block_rows = min(block_rows, max(pack, (rows // 2) // pack * pack))

    def fwd(x):
        flat = x.reshape(-1)
        ten = jnp.asarray(10, dtype=dtype)
        if tail:
            main = lax.slice(flat, (0,), (rows * C,))
        else:
            main = flat
        out_main = _slab_add10(main.reshape(rows, C), block_rows, vmem_limit)
        out = out_main.reshape(-1)
        if tail:
            # Tiny ragged tail (< C elems): plain JAX, no pad/slice full passes.
            out = jnp.concatenate([out, lax.slice(flat, (rows * C,), (total,)) + ten])
        return out.reshape(shape)

    # Donation only helps (and only aliases cleanly) when the whole output is
    # the pallas result; skip it on the ragged-tail path.
    donate_args = (0,) if (donate and tail == 0) else ()
    return jax.jit(fwd, donate_argnums=donate_args)


def tudui_forward(x, donate=False):
    """Equivalent of Tudui.forward: returns x + 10, same shape & dtype.

    If donate=True the caller must not reuse `x` afterwards (its buffer may be
    reused in place via input_output_aliases).
    """
    x = jnp.asarray(x)
    # Tiny inputs (scalar, small vectors): plain JAX, no custom call.
    if x.size < _MIN_KERNEL_ELEMS:
        return x + jnp.asarray(10, dtype=x.dtype)
    fn = _compiled_forward(tuple(int(d) for d in x.shape),
                           jnp.dtype(x.dtype).name, bool(donate))
    return fn(x)


if __name__ == "__main__":
    key = jax.random.PRNGKey(0)
    k1, k2 = jax.random.split(key)

    # Primary tensor input (batch=2, channels=4, 16x16) -> lane-dense kernel path.
    x = jax.random.normal(key, (2, 4, 16, 16), dtype=jnp.float32)
    y = tudui_forward(x)
    jax.block_until_ready(y)
    assert y.shape == x.shape and y.dtype == x.dtype
    assert jnp.allclose(y, x + 10.0), "mismatch on tensor input"

    # Scalar input, mirroring the tutorial's `x = torch.tensor(1.0)` (short-circuit).
    ys = tudui_forward(jnp.float32(1.0))
    jax.block_until_ready(ys)
    assert jnp.allclose(ys, jnp.float32(11.0)), "mismatch on scalar input"

    # Awkward size (5*13*37 = 2405 elems) -> lane-dense prefix + plain-JAX tail.
    xr = jax.random.normal(k1, (5, 13, 37), dtype=jnp.float32)
    yr = tudui_forward(xr)
    jax.block_until_ready(yr)
    assert jnp.allclose(yr, xr + 10.0), "mismatch on ragged input"

    # Large multi-block pipelined grid (8 MiB f32, >=2 grid steps for megacore).
    # Donated so input_output_aliases can run fully in place; xb not used after.
    xb = jax.random.normal(k2, (1024, 2048), dtype=jnp.float32)
    expected = xb + 10.0
    yb = tudui_forward(xb, donate=True)
    jax.block_until_ready(yb)
    assert jnp.allclose(yb, expected), "mismatch on large input"

    print("KERNEL_OK")
</pallas_src>

<mosaic_0001>
module attributes {stable_mosaic.version = 11 : i64} {
  func.func @_add10_kernel(%arg0: i32, %arg1: memref<1x2048xf32, #tpu.memory_space<vmem>>, %arg2: memref<1x2048xf32, #tpu.memory_space<vmem>>) attributes {dimension_semantics = [#tpu.dimension_semantics<parallel>], iteration_bounds = array<i64: 1>, scalar_prefetch = 0 : i64, scratch_operands = 0 : i64, tpu.core_type = #tpu.core_type<tc>, window_params = [{transform_indices = @transform_0, window_bounds = array<i64: 1, 2048>}, {transform_indices = @transform_1, window_bounds = array<i64: 1, 2048>}]} {
    %c0 = arith.constant 0 : index
    %c0_0 = arith.constant 0 : index
    %0 = vector.load %arg1[%c0, %c0_0] : memref<1x2048xf32, #tpu.memory_space<vmem>>, vector<1x2048xf32>
    %cst = arith.constant 1.000000e+01 : f32
    %1 = vector.broadcast %cst : f32 to vector<1x2048xf32>
    %2 = arith.addf %0, %1 : vector<1x2048xf32>
    %c0_1 = arith.constant 0 : index
    %c0_2 = arith.constant 0 : index
    %3 = vector.load %arg2[%c0_1, %c0_2] : memref<1x2048xf32, #tpu.memory_space<vmem>>, vector<1x2048xf32>
    tpu.vector_store %arg2[%c0_1, %c0_2], %2 {strides = array<i32>} : memref<1x2048xf32, #tpu.memory_space<vmem>>, vector<1x2048xf32>,
    return
  }
  func.func @transform_0(%arg0: i32) -> (i32, i32) {
    %c0_i32 = arith.constant 0 : i32
    %c0_i32_0 = arith.constant 0 : i32
    return %arg0, %c0_i32 : i32, i32
  }
  func.func @transform_1(%arg0: i32) -> (i32, i32) {
    %c0_i32 = arith.constant 0 : i32
    %c0_i32_0 = arith.constant 0 : i32
    return %arg0, %c0_i32 : i32, i32
  }
}

</mosaic_0001>

<llo_original>
// kernel: fwd.1
$region0: #{fwd.1}
  #allocation0 [shape = 'u32[]', space=smem, size = 0x4, offset = 0x4, fixed_abs, tag = 'smem constant byte address 0x4 - core index']
  #allocation1 [shape = 'u32[144,128]{1,0:T(1,128)}', space=vmem, size = 0x12000, scoped, tag = 'internal scratch']
  %s0 = inlined_call_operand.vmem [shape: f32[1,2048], index: 0, kind: input, shape index: {}, may-alias: {0,1}]
  %s1 = inlined_call_operand.vmem [shape: f32[1,2048], index: 1, kind: output, shape index: {}, may-alias: {0,1}]
  %s2 = sld [smem:[#allocation0]]
  $region14: #{fwd.1} parent=0
    _
  %s4 = ssub.s32 1, %s2
  %s5 = scalar_select 0, %s4, %s2
  // Predicated region
  $region2: #{fwd.1} parent=0 // pred_check
    _
  $region3: #{fwd.1} parent=0 // pred_check_branch
    %7 = sbr.rel (0) target = $region5
  $region4: #{fwd.1} parent=0 // pred_region
    _
  $region5: #{fwd.1} parent=0 // pred_fallthru
    _
  %v8 = vld [vmem:[%s0] sm:$0xff]
  %v9 = vld [vmem:[%s0 + $0x8] sm:$0xff]
  %v10 = vadd.f32 %v8, 10.0
  %v11 = vadd.f32 %v9, 10.0
  %12 = vst [vmem:[%s1] sm:$0xff] %v10
  %13 = vst [vmem:[%s1 + $0x8] sm:$0xff] %v11
  // Predicated region
  $region6: #{fwd.1} parent=0 // pred_check
    _
  $region7: #{fwd.1} parent=0 // pred_check_branch
    %15 = sbr.rel (0) target = $region9
  $region8: #{fwd.1} parent=0 // pred_region
    _
  $region9: #{fwd.1} parent=0 // pred_fallthru
    _
  // Predicated region
  $region10: #{fwd.1} parent=0 // pred_check
    _
  $region11: #{fwd.1} parent=0 // pred_check_branch
    %17 = sbr.rel (0) target = $region13
  $region12: #{fwd.1} parent=0 // pred_region
    _
  $region13: #{fwd.1} parent=0 // pred_fallthru
    _

</llo_original>
